<compile_context>
chip_gen: v7x
topology: tpu7x:2x2x1
jax: 0.10.0
libtpu: 0.0.40
codegen_flags: <defaults>
</compile_context>

<pallas_src>
import math

import jax
import jax.numpy as jnp
import numpy as np
from jax.experimental import pallas as pl
from jax.experimental.pallas import tpu as pltpu

# ----- small synthetic config (consistent with SigLipVisionConfig fields) ----
B = 2            # batch
S = 8            # sequence length (number of vision tokens)
H = 32           # hidden_size
NUM_HEADS = 4    # num_attention_heads
HEAD_DIM = H // NUM_HEADS
INTER = 64       # intermediate_size
EPS = 1e-6       # layer_norm_eps
SCALE = 1.0 / math.sqrt(HEAD_DIM)

LANES = 128      # every packed block is 128-lane dense

# Row layout of the single packed weight slab (all offsets are multiples of 8).
R_WF  = 0                  # (H, 128)   [wv | w_score*scale | 0]
R_G   = R_WF + H           # (128, 128) head-broadcast one-hot (constant)
R_WO  = R_G + LANES        # (128, 128) wo zero-padded
R_FC1 = R_WO + LANES       # (128, 128) fc1_w zero-padded
R_FC2 = R_FC1 + LANES      # (128, 128) fc2_w zero-padded
R_VEC = R_FC2 + LANES      # (8, 128)   bias / LayerNorm vectors, zero-padded lanes
SLAB_ROWS = R_VEC + 8      # 552


def mha_pool_kernel(x_ref, w_ref, out_ref):
    # Whole batch in one shot: (B, S, H) -> (B*S, H) (leading-dim merge, free).
    x2 = x_ref[...].reshape(B * S, H)

    # Row-slices of the packed weight slab (static, 8-aligned sublane slices).
    w_fused = w_ref[R_WF:R_WF + H, :]            # (H, 128)
    g       = w_ref[R_G:R_G + LANES, :]          # (128, 128)
    wo      = w_ref[R_WO:R_WO + LANES, :]        # (128, 128)
    fc1_w   = w_ref[R_FC1:R_FC1 + LANES, :]      # (128, 128)
    fc2_w   = w_ref[R_FC2:R_FC2 + LANES, :]      # (128, 128)
    b_fused = w_ref[R_VEC + 0:R_VEC + 1, :]      # (1, 128) [bv | b_score*scale | 0]
    bo      = w_ref[R_VEC + 1:R_VEC + 2, :]      # (1, 128)
    ln_g    = w_ref[R_VEC + 2:R_VEC + 3, :]      # (1, 128) zero on pad lanes
    ln_b    = w_ref[R_VEC + 3:R_VEC + 4, :]      # (1, 128) zero on pad lanes
    fc1_b   = w_ref[R_VEC + 4:R_VEC + 5, :]      # (1, 128)
    fc2_b   = w_ref[R_VEC + 5:R_VEC + 6, :]      # (1, 128)

    # ---- fused value + (folded q/k) score projection: ONE MXU pass over x ----
    # lanes [0, H)          : v = x @ wv + bv
    # lanes [H, H+NUM_HEADS): scores_h = scale * (q_h . k_h(x))   (q/k fold in wrapper)
    # lanes >= H+NUM_HEADS  : exactly zero
    y = jnp.dot(x2, w_fused, preferred_element_type=jnp.float32) + b_fused   # (B*S, 128)

    # ---- softmax over the sequence axis (per lane; only the score lanes are used) ----
    y3 = y.reshape(B, S, LANES)
    s3 = y3 - jnp.max(y3, axis=1, keepdims=True)
    p3 = jnp.exp(s3)
    p3 = p3 / jnp.sum(p3, axis=1, keepdims=True)                              # (B, S, 128)

    # ---- broadcast head probabilities back onto the H value lanes ----
    # g[H+h, d] = 1 iff d < H and d // HEAD_DIM == h ; all other rows/cols are 0,
    # so only the score lanes contribute and p_full is zero on lanes >= H.
    p_full = jnp.dot(p3.reshape(B * S, LANES), g,
                     preferred_element_type=jnp.float32)                      # (B*S, 128)

    # attn[b, d] = sum_s p[b, s, head(d)] * v[b, s, d]   (pad lanes stay zero)
    attn = jnp.sum((p_full * y).reshape(B, S, LANES), axis=1)                 # (B, 128)

    # ---- output projection (+ bias); this is the residual branch ----
    attn = jnp.dot(attn, wo, preferred_element_type=jnp.float32) + bo         # (B, 128)
    residual = attn                                                           # zeros on pad lanes

    # ---- LayerNorm over the H valid lanes ----
    # Pad lanes of `attn` are exactly zero, so sum/H and sum(x^2)/H are the true
    # moments; ln_g/ln_b are zero-padded so pad lanes stay zero after the affine.
    mean = jnp.sum(attn, axis=-1, keepdims=True) * (1.0 / H)
    ex2  = jnp.sum(attn * attn, axis=-1, keepdims=True) * (1.0 / H)
    var  = ex2 - mean * mean
    ln   = (attn - mean) * jax.lax.rsqrt(var + EPS) * ln_g + ln_b             # (B, 128)

    # ---- MLP: fc1 -> gelu(tanh) -> fc2 ----
    h1 = jnp.dot(ln, fc1_w, preferred_element_type=jnp.float32) + fc1_b       # (B, 128)
    c = math.sqrt(2.0 / math.pi)
    h1 = 0.5 * h1 * (1.0 + jnp.tanh(c * (h1 + 0.044715 * h1 * h1 * h1)))
    h2 = jnp.dot(h1, fc2_w, preferred_element_type=jnp.float32) + fc2_b       # (B, 128)

    # residual + mlp; valid result lives on lanes [0, H), pad lanes are zero.
    out_ref[...] = residual + h2


def _pad(a, rows, cols=LANES):
    return jnp.pad(a, ((0, rows - a.shape[0]), (0, cols - a.shape[1])))


def _build_weight_slab(p):
    """Fold q/k, bake the head one-hot, and pack everything into one (552,128) slab."""
    # Batch-invariant q/k fold (tiny, parameter-only): scores = x @ w_score + b_score.
    q = p["probe"] @ p["wq"] + p["bq"]                                    # (1, H)
    head_of_lane = jnp.arange(H) // HEAD_DIM                              # (H,)
    head_mask = (head_of_lane[None, :] ==
                 jnp.arange(NUM_HEADS)[:, None]).astype(jnp.float32)      # (nh, H)
    q_masked = q * head_mask                                              # (nh, H)
    w_score = (p["wk"] @ q_masked.T) * SCALE                              # (H, nh)
    b_score = (p["bk"] @ q_masked.T) * SCALE                              # (1, nh)

    # Fused projection block: [wv | w_score] padded to 128 lanes.
    w_fused = _pad(jnp.concatenate([p["wv"], w_score], axis=1), H)        # (H, 128)

    # Constant head-broadcast one-hot, built at trace time (numpy), not in-kernel.
    g_np = np.zeros((LANES, LANES), np.float32)
    for h in range(NUM_HEADS):
        g_np[H + h, h * HEAD_DIM:(h + 1) * HEAD_DIM] = 1.0
    g128 = jnp.asarray(g_np)

    wo_pad  = _pad(p["wo"], LANES)                                        # (128, 128)
    fc1_pad = _pad(p["fc1_w"], LANES)                                     # (128, 128)
    fc2_pad = _pad(p["fc2_w"], LANES)                                     # (128, 128)

    vec = jnp.concatenate(
        [_pad(jnp.concatenate([p["bv"], b_score], axis=1), 1),            # b_fused
         _pad(p["bo"], 1),
         _pad(p["ln_g"], 1),
         _pad(p["ln_b"], 1),
         _pad(p["fc1_b"], 1),
         _pad(p["fc2_b"], 1),
         jnp.zeros((2, LANES), jnp.float32)], axis=0)                     # (8, 128)

    slab = jnp.concatenate([w_fused, g128, wo_pad, fc1_pad, fc2_pad, vec], axis=0)
    assert slab.shape == (SLAB_ROWS, LANES)
    return slab


def siglip_attention_pooling_head(x, params):
    """x: (B, S, H) float32 -> (B, H) float32 (== PyTorch forward output)."""
    slab = _build_weight_slab(params)
    vmem = lambda: pl.BlockSpec(memory_space=pltpu.MemorySpace.VMEM)
    out128 = pl.pallas_call(
        mha_pool_kernel,
        out_shape=jax.ShapeDtypeStruct((B, LANES), jnp.float32),
        in_specs=[vmem(), vmem()],
        out_specs=vmem(),
    )(x, slab)
    # Valid hidden lanes are the first H; the slice happens outside the kernel.
    return out128[:, :H]


def reference_forward(x, p):
    """Pure-JAX reference mirroring the PyTorch module semantics."""
    def one(xb):                                   # xb: (S, H)
        q = p["probe"] @ p["wq"] + p["bq"]         # (1, H)
        k = xb @ p["wk"] + p["bk"]                 # (S, H)
        v = xb @ p["wv"] + p["bv"]                 # (S, H)
        qh = q.reshape(1, NUM_HEADS, HEAD_DIM).transpose(1, 0, 2)   # (nh,1,hd)
        kh = k.reshape(S, NUM_HEADS, HEAD_DIM).transpose(1, 0, 2)   # (nh,S,hd)
        vh = v.reshape(S, NUM_HEADS, HEAD_DIM).transpose(1, 0, 2)   # (nh,S,hd)
        scores = jnp.einsum("hqd,hkd->hqk", qh, kh) / math.sqrt(HEAD_DIM)
        probs = jax.nn.softmax(scores, axis=-1)
        oh = jnp.einsum("hqk,hkd->hqd", probs, vh)                  # (nh,1,hd)
        attn = oh.transpose(1, 0, 2).reshape(1, H)
        attn = attn @ p["wo"] + p["bo"]
        residual = attn
        mean = attn.mean(-1, keepdims=True)
        var = ((attn - mean) ** 2).mean(-1, keepdims=True)
        ln = (attn - mean) / jnp.sqrt(var + EPS) * p["ln_g"] + p["ln_b"]
        h1 = ln @ p["fc1_w"] + p["fc1_b"]
        c = math.sqrt(2.0 / math.pi)
        h1 = 0.5 * h1 * (1.0 + jnp.tanh(c * (h1 + 0.044715 * h1 ** 3)))
        h2 = h1 @ p["fc2_w"] + p["fc2_b"]
        return (residual + h2)[0]
    return jax.vmap(one)(x)


def make_params(key):
    ks = jax.random.split(key, 16)
    n = lambda k, shape, s=0.05: (s * jax.random.normal(k, shape)).astype(jnp.float32)
    return {
        "probe": n(ks[0], (1, H), 1.0),
        "wq": n(ks[1], (H, H)), "bq": n(ks[2], (1, H)),
        "wk": n(ks[3], (H, H)), "bk": n(ks[4], (1, H)),
        "wv": n(ks[5], (H, H)), "bv": n(ks[6], (1, H)),
        "wo": n(ks[7], (H, H)), "bo": n(ks[8], (1, H)),
        "ln_g": (1.0 + n(ks[9], (1, H))).astype(jnp.float32),
        "ln_b": n(ks[10], (1, H)),
        "fc1_w": n(ks[11], (H, INTER)), "fc1_b": n(ks[12], (1, INTER)),
        "fc2_w": n(ks[13], (INTER, H)), "fc2_b": n(ks[14], (1, H)),
    }


if __name__ == "__main__":
    key = jax.random.PRNGKey(0)
    kx, kp = jax.random.split(key)
    x = jax.random.normal(kx, (B, S, H), dtype=jnp.float32)
    params = make_params(kp)

    out = jax.block_until_ready(siglip_attention_pooling_head(x, params))
    ref = jax.block_until_ready(reference_forward(x, params))

    np.testing.assert_allclose(np.asarray(out), np.asarray(ref),
                               rtol=2e-3, atol=1e-3)
    assert out.shape == (B, H)
    print("KERNEL_OK")
</pallas_src>

<mosaic_0001>
module attributes {stable_mosaic.version = 11 : i64} {
  func.func @mha_pool_kernel(%arg0: memref<2x8x32xf32, #tpu.memory_space<vmem>>, %arg1: memref<552x128xf32, #tpu.memory_space<vmem>>, %arg2: memref<2x128xf32, #tpu.memory_space<vmem>>) attributes {dimension_semantics = [], scalar_prefetch = 0 : i64, scratch_operands = 0 : i64, tpu.core_type = #tpu.core_type<tc>} {
    %c0 = arith.constant 0 : index
    %c0_0 = arith.constant 0 : index
    %c0_1 = arith.constant 0 : index
    %0 = vector.load %arg0[%c0, %c0_0, %c0_1] : memref<2x8x32xf32, #tpu.memory_space<vmem>>, vector<2x8x32xf32>
    %1 = vector.shape_cast %0 : vector<2x8x32xf32> to vector<16x32xf32>
    %c0_2 = arith.constant 0 : index
    %c0_3 = arith.constant 0 : index
    %2 = vector.load %arg1[%c0_2, %c0_3] : memref<552x128xf32, #tpu.memory_space<vmem>>, vector<32x128xf32>
    %c32 = arith.constant 32 : index
    %c0_4 = arith.constant 0 : index
    %3 = vector.load %arg1[%c32, %c0_4] : memref<552x128xf32, #tpu.memory_space<vmem>>, vector<128x128xf32>
    %c160 = arith.constant 160 : index
    %c0_5 = arith.constant 0 : index
    %4 = vector.load %arg1[%c160, %c0_5] : memref<552x128xf32, #tpu.memory_space<vmem>>, vector<128x128xf32>
    %c288 = arith.constant 288 : index
    %c0_6 = arith.constant 0 : index
    %5 = vector.load %arg1[%c288, %c0_6] : memref<552x128xf32, #tpu.memory_space<vmem>>, vector<128x128xf32>
    %c416 = arith.constant 416 : index
    %c0_7 = arith.constant 0 : index
    %6 = vector.load %arg1[%c416, %c0_7] : memref<552x128xf32, #tpu.memory_space<vmem>>, vector<128x128xf32>
    %c544 = arith.constant 544 : index
    %c0_8 = arith.constant 0 : index
    %7 = vector.load %arg1[%c544, %c0_8] : memref<552x128xf32, #tpu.memory_space<vmem>>, vector<1x128xf32>
    %c545 = arith.constant 545 : index
    %c0_9 = arith.constant 0 : index
    %8 = vector.load %arg1[%c545, %c0_9] : memref<552x128xf32, #tpu.memory_space<vmem>>, vector<1x128xf32>
    %c546 = arith.constant 546 : index
    %c0_10 = arith.constant 0 : index
    %9 = vector.load %arg1[%c546, %c0_10] : memref<552x128xf32, #tpu.memory_space<vmem>>, vector<1x128xf32>
    %c547 = arith.constant 547 : index
    %c0_11 = arith.constant 0 : index
    %10 = vector.load %arg1[%c547, %c0_11] : memref<552x128xf32, #tpu.memory_space<vmem>>, vector<1x128xf32>
    %c548 = arith.constant 548 : index
    %c0_12 = arith.constant 0 : index
    %11 = vector.load %arg1[%c548, %c0_12] : memref<552x128xf32, #tpu.memory_space<vmem>>, vector<1x128xf32>
    %c549 = arith.constant 549 : index
    %c0_13 = arith.constant 0 : index
    %12 = vector.load %arg1[%c549, %c0_13] : memref<552x128xf32, #tpu.memory_space<vmem>>, vector<1x128xf32>
    %cst = arith.constant dense<0.000000e+00> : vector<16x128xf32>
    %13 = tpu.matmul %1, %2, %cst {dimension_numbers = #tpu.dot_dimension_numbers<[1], [0], [0], [1], [0, 0, 1, 1], [], []>} : vector<16x32xf32>, vector<32x128xf32>, vector<16x128xf32> -> vector<16x128xf32>
    %14 = vector.broadcast %7 : vector<1x128xf32> to vector<16x128xf32>
    %15 = arith.addf %13, %14 : vector<16x128xf32>
    %16 = vector.shape_cast %15 : vector<16x128xf32> to vector<2x8x128xf32>
    %cst_14 = arith.constant dense<0xFF800000> : vector<2x128xf32>
    %17 = vector.multi_reduction <maximumf>, %16, %cst_14 [1] : vector<2x8x128xf32> to vector<2x128xf32>
    %18 = vector.shape_cast %17 : vector<2x128xf32> to vector<2x1x128xf32>
    %19 = vector.broadcast %18 : vector<2x1x128xf32> to vector<2x8x128xf32>
    %20 = arith.subf %16, %19 : vector<2x8x128xf32>
    %21 = math.exp %20 : vector<2x8x128xf32>
    %cst_15 = arith.constant dense<0.000000e+00> : vector<2x128xf32>
    %22 = vector.multi_reduction <add>, %21, %cst_15 [1] : vector<2x8x128xf32> to vector<2x128xf32>
    %23 = vector.shape_cast %22 : vector<2x128xf32> to vector<2x1x128xf32>
    %24 = vector.broadcast %23 : vector<2x1x128xf32> to vector<2x8x128xf32>
    %25 = arith.divf %21, %24 : vector<2x8x128xf32>
    %26 = vector.shape_cast %25 : vector<2x8x128xf32> to vector<16x128xf32>
    %cst_16 = arith.constant dense<0.000000e+00> : vector<16x128xf32>
    %27 = tpu.matmul %26, %3, %cst_16 {dimension_numbers = #tpu.dot_dimension_numbers<[1], [0], [0], [1], [0, 0, 1, 1], [], []>} : vector<16x128xf32>, vector<128x128xf32>, vector<16x128xf32> -> vector<16x128xf32>
    %28 = arith.mulf %27, %15 : vector<16x128xf32>
    %29 = vector.shape_cast %28 : vector<16x128xf32> to vector<2x8x128xf32>
    %cst_17 = arith.constant dense<0.000000e+00> : vector<2x128xf32>
    %30 = vector.multi_reduction <add>, %29, %cst_17 [1] : vector<2x8x128xf32> to vector<2x128xf32>
    %cst_18 = arith.constant dense<0.000000e+00> : vector<2x128xf32>
    %31 = tpu.matmul %30, %4, %cst_18 {dimension_numbers = #tpu.dot_dimension_numbers<[1], [0], [0], [1], [0, 0, 1, 1], [], []>} : vector<2x128xf32>, vector<128x128xf32>, vector<2x128xf32> -> vector<2x128xf32>
    %32 = vector.broadcast %8 : vector<1x128xf32> to vector<2x128xf32>
    %33 = arith.addf %31, %32 : vector<2x128xf32>
    %cst_19 = arith.constant dense<0.000000e+00> : vector<2xf32>
    %34 = vector.multi_reduction <add>, %33, %cst_19 [1] : vector<2x128xf32> to vector<2xf32>
    %35 = vector.shape_cast %34 : vector<2xf32> to vector<2x1xf32>
    %cst_20 = arith.constant 3.125000e-02 : f32
    %36 = vector.broadcast %cst_20 : f32 to vector<2x1xf32>
    %37 = arith.mulf %35, %36 : vector<2x1xf32>
    %38 = arith.mulf %33, %33 : vector<2x128xf32>
    %cst_21 = arith.constant dense<0.000000e+00> : vector<2xf32>
    %39 = vector.multi_reduction <add>, %38, %cst_21 [1] : vector<2x128xf32> to vector<2xf32>
    %40 = vector.shape_cast %39 : vector<2xf32> to vector<2x1xf32>
    %cst_22 = arith.constant 3.125000e-02 : f32
    %41 = vector.broadcast %cst_22 : f32 to vector<2x1xf32>
    %42 = arith.mulf %40, %41 : vector<2x1xf32>
    %43 = arith.mulf %37, %37 : vector<2x1xf32>
    %44 = arith.subf %42, %43 : vector<2x1xf32>
    %45 = vector.broadcast %37 : vector<2x1xf32> to vector<2x128xf32>
    %46 = arith.subf %33, %45 : vector<2x128xf32>
    %cst_23 = arith.constant 9.99999997E-7 : f32
    %47 = vector.broadcast %cst_23 : f32 to vector<2x1xf32>
    %48 = arith.addf %44, %47 : vector<2x1xf32>
    %49 = math.rsqrt %48 : vector<2x1xf32>
    %50 = vector.broadcast %49 : vector<2x1xf32> to vector<2x128xf32>
    %51 = arith.mulf %46, %50 : vector<2x128xf32>
    %52 = vector.broadcast %9 : vector<1x128xf32> to vector<2x128xf32>
    %53 = arith.mulf %51, %52 : vector<2x128xf32>
    %54 = vector.broadcast %10 : vector<1x128xf32> to vector<2x128xf32>
    %55 = arith.addf %53, %54 : vector<2x128xf32>
    %cst_24 = arith.constant dense<0.000000e+00> : vector<2x128xf32>
    %56 = tpu.matmul %55, %5, %cst_24 {dimension_numbers = #tpu.dot_dimension_numbers<[1], [0], [0], [1], [0, 0, 1, 1], [], []>} : vector<2x128xf32>, vector<128x128xf32>, vector<2x128xf32> -> vector<2x128xf32>
    %57 = vector.broadcast %11 : vector<1x128xf32> to vector<2x128xf32>
    %58 = arith.addf %56, %57 : vector<2x128xf32>
    %cst_25 = arith.constant 5.000000e-01 : f32
    %59 = vector.broadcast %cst_25 : f32 to vector<2x128xf32>
    %60 = arith.mulf %59, %58 : vector<2x128xf32>
    %cst_26 = arith.constant 4.471500e-02 : f32
    %61 = vector.broadcast %cst_26 : f32 to vector<2x128xf32>
    %62 = arith.mulf %61, %58 : vector<2x128xf32>
    %63 = arith.mulf %62, %58 : vector<2x128xf32>
    %64 = arith.mulf %63, %58 : vector<2x128xf32>
    %65 = arith.addf %58, %64 : vector<2x128xf32>
    %cst_27 = arith.constant 0.797884583 : f32
    %66 = vector.broadcast %cst_27 : f32 to vector<2x128xf32>
    %67 = arith.mulf %66, %65 : vector<2x128xf32>
    %68 = math.tanh %67 : vector<2x128xf32>
    %cst_28 = arith.constant 1.000000e+00 : f32
    %69 = vector.broadcast %cst_28 : f32 to vector<2x128xf32>
    %70 = arith.addf %69, %68 : vector<2x128xf32>
    %71 = arith.mulf %60, %70 : vector<2x128xf32>
    %cst_29 = arith.constant dense<0.000000e+00> : vector<2x128xf32>
    %72 = tpu.matmul %71, %6, %cst_29 {dimension_numbers = #tpu.dot_dimension_numbers<[1], [0], [0], [1], [0, 0, 1, 1], [], []>} : vector<2x128xf32>, vector<128x128xf32>, vector<2x128xf32> -> vector<2x128xf32>
    %73 = vector.broadcast %12 : vector<1x128xf32> to vector<2x128xf32>
    %74 = arith.addf %72, %73 : vector<2x128xf32>
    %75 = arith.addf %33, %74 : vector<2x128xf32>
    %c0_30 = arith.constant 0 : index
    %c0_31 = arith.constant 0 : index
    %76 = vector.load %arg2[%c0_30, %c0_31] : memref<2x128xf32, #tpu.memory_space<vmem>>, vector<2x128xf32>
    tpu.vector_store %arg2[%c0_30, %c0_31], %75 {strides = array<i32>} : memref<2x128xf32, #tpu.memory_space<vmem>>, vector<2x128xf32>,
    return
  }
}

</mosaic_0001>

<llo_original>
// kernel: tpu_custom_call.1
$region0: #{tpu_custom_call.1}
  #allocation0 [shape = 'u32[]', space=smem, size = 0x4, offset = 0x4, fixed_abs, tag = 'smem constant byte address 0x4 - core index']
  #allocation1 [shape = 'u32[144,128]{1,0:T(1,128)}', space=vmem, size = 0x12000, scoped, tag = 'internal scratch']
  %s0 = inlined_call_operand.hbm [shape: f32[2,8,32], index: 0, kind: input, shape index: {}]
  %s1 = inlined_call_operand.hbm [shape: f32[552,128], index: 1, kind: input, shape index: {}]
  %s2 = inlined_call_operand.hbm [shape: f32[2,128], index: 2, kind: output, shape index: {}]
  %s3 = sld [smem:[#allocation0]]
  $region26: #{tpu_custom_call.1} parent=0
    _
  %s5 = ssub.s32 1, %s3
  %s6 = scalar_select 0, %s5, %s3
  $region1: #{tpu_custom_call.1} parent=0
    #allocation2 [shape = 'u8[8192]{0}', space=vmem, size = 0x2000, scoped, tag = 'input window, operand 0, single buffered']
    #allocation3 [shape = 's32[1]{0}', space=sflag, size = 0x4, scoped, tag = 'scoped memory for tpu_custom_call.1']
    #allocation4 [shape = 's32[1]{0}', space=sflag, size = 0x4, scoped, tag = 'scoped memory for tpu_custom_call.1']
    #allocation5 [shape = 'u8[282624]{0}', space=vmem, size = 0x45000, scoped, tag = 'input window, operand 1, single buffered']
    #allocation6 [shape = 's32[1]{0}', space=sflag, size = 0x4, scoped, tag = 'scoped memory for tpu_custom_call.1']
    #allocation7 [shape = 'u8[1024]{0}', space=vmem, size = 0x400, scoped, tag = 'output window, operand 0, single buffered']
    %7 = vsyncpa [#allocation3], 0
    %8 = vsyncpa [#allocation6], 0
    %9 = vsyncpa [#allocation4], 0
    // Predicated region
    $region2: #{tpu_custom_call.1} parent=1 // pred_check
      _
    $region3: #{tpu_custom_call.1} parent=1 // pred_check_branch
      %11 = sbr.rel (0) target = $region5
    $region4: #{tpu_custom_call.1} parent=1 // pred_region
      %s13 = ssub.s32 256, 256
      %14 = vsyncadd [#allocation3], %s13
      %s15 = sshll.u32 [#allocation2], 4
      %s16 = int_to_ptr.vmem [resolvable:$true] %s15
      %21 = dma.hbm_to_vmem [thread:$0]  %s0, 256, %s16, [#allocation3], 128, 128, 8
    $region5: #{tpu_custom_call.1} parent=1 // pred_fallthru
      _
    // Predicated region
    $region6: #{tpu_custom_call.1} parent=1 // pred_check
      _
    $region7: #{tpu_custom_call.1} parent=1 // pred_check_branch
      %23 = sbr.rel (0) target = $region9
    $region8: #{tpu_custom_call.1} parent=1 // pred_region
      %s25 = ssub.s32 8832, 8832
      %26 = vsyncadd [#allocation6], %s25
      %s27 = sshll.u32 [#allocation5], 4
      %s28 = int_to_ptr.vmem [resolvable:$true] %s27
      %33 = dma.hbm_to_vmem [thread:$0]  %s1, 8832, %s28, [#allocation6], 128, 128, 8
    $region9: #{tpu_custom_call.1} parent=1 // pred_fallthru
      _
    // Predicated region
    $region10: #{tpu_custom_call.1} parent=1 // pred_check
      _
    $region11: #{tpu_custom_call.1} parent=1 // pred_check_branch
      %35 = sbr.rel (0) target = $region13
    $region12: #{tpu_custom_call.1} parent=1 // pred_region
      %36 = dma.done [#allocation3], 256
    $region13: #{tpu_custom_call.1} parent=1 // pred_fallthru
      _
    // Predicated region
    $region14: #{tpu_custom_call.1} parent=1 // pred_check
      _
    $region15: #{tpu_custom_call.1} parent=1 // pred_check_branch
      %38 = sbr.rel (0) target = $region17
    $region16: #{tpu_custom_call.1} parent=1 // pred_region
      %39 = dma.done [#allocation6], 8832
    $region17: #{tpu_custom_call.1} parent=1 // pred_fallthru
      _
    %v40 = vld [vmem:[#allocation2] sm:$0xff]
    %v41 = vld [vmem:[#allocation2 + $0x8] sm:$0xff]
    %v42 = vld [vmem:[#allocation5] sm:$0xff]
    %v43 = vld [vmem:[#allocation5 + $0x8] sm:$0xff]
    %v44 = vld [vmem:[#allocation5 + $0x10] sm:$0xff]
    %v45 = vld [vmem:[#allocation5 + $0x18] sm:$0xff]
    %v46 = vld [vmem:[#allocation5 + $0x20] sm:$0xff]
    %v47 = vld [vmem:[#allocation5 + $0x28] sm:$0xff]
    %v48 = vld [vmem:[#allocation5 + $0x30] sm:$0xff]
    %v49 = vld [vmem:[#allocation5 + $0x38] sm:$0xff]
    %v50 = vld [vmem:[#allocation5 + $0x40] sm:$0xff]
    %v51 = vld [vmem:[#allocation5 + $0x48] sm:$0xff]
    %v52 = vld [vmem:[#allocation5 + $0x50] sm:$0xff]
    %v53 = vld [vmem:[#allocation5 + $0x58] sm:$0xff]
    %v54 = vld [vmem:[#allocation5 + $0x60] sm:$0xff]
    %v55 = vld [vmem:[#allocation5 + $0x68] sm:$0xff]
    %v56 = vld [vmem:[#allocation5 + $0x70] sm:$0xff]
    %v57 = vld [vmem:[#allocation5 + $0x78] sm:$0xff]
    %v58 = vld [vmem:[#allocation5 + $0x80] sm:$0xff]
    %v59 = vld [vmem:[#allocation5 + $0x88] sm:$0xff]
    %v60 = vld [vmem:[#allocation5 + $0x90] sm:$0xff]
    %v61 = vld [vmem:[#allocation5 + $0x98] sm:$0xff]
    %v62 = vld [vmem:[#allocation5 + $0xa0] sm:$0xff]
    %v63 = vld [vmem:[#allocation5 + $0xa8] sm:$0xff]
    %v64 = vld [vmem:[#allocation5 + $0xb0] sm:$0xff]
    %v65 = vld [vmem:[#allocation5 + $0xb8] sm:$0xff]
    %v66 = vld [vmem:[#allocation5 + $0xc0] sm:$0xff]
    %v67 = vld [vmem:[#allocation5 + $0xc8] sm:$0xff]
    %v68 = vld [vmem:[#allocation5 + $0xd0] sm:$0xff]
    %v69 = vld [vmem:[#allocation5 + $0xd8] sm:$0xff]
    %v70 = vld [vmem:[#allocation5 + $0xe0] sm:$0xff]
    %v71 = vld [vmem:[#allocation5 + $0xe8] sm:$0xff]
    %v72 = vld [vmem:[#allocation5 + $0xf0] sm:$0xff]
    %v73 = vld [vmem:[#allocation5 + $0xf8] sm:$0xff]
    %v74 = vld [vmem:[#allocation5 + $0x100] sm:$0xff]
    %v75 = vld [vmem:[#allocation5 + $0x108] sm:$0xff]
    %v76 = vld [vmem:[#allocation5 + $0x110] sm:$0xff]
    %v77 = vld [vmem:[#allocation5 + $0x118] sm:$0xff]
    %v78 = vld [vmem:[#allocation5 + $0x120] sm:$0xff]
    %v79 = vld [vmem:[#allocation5 + $0x128] sm:$0xff]
    %v80 = vld [vmem:[#allocation5 + $0x130] sm:$0xff]
    %v81 = vld [vmem:[#allocation5 + $0x138] sm:$0xff]
    %v82 = vld [vmem:[#allocation5 + $0x140] sm:$0xff]
    %v83 = vld [vmem:[#allocation5 + $0x148] sm:$0xff]
    %v84 = vld [vmem:[#allocation5 + $0x150] sm:$0xff]
    %v85 = vld [vmem:[#allocation5 + $0x158] sm:$0xff]
    %v86 = vld [vmem:[#allocation5 + $0x160] sm:$0xff]
    %v87 = vld [vmem:[#allocation5 + $0x168] sm:$0xff]
    %v88 = vld [vmem:[#allocation5 + $0x170] sm:$0xff]
    %v89 = vld [vmem:[#allocation5 + $0x178] sm:$0xff]
    %v90 = vld [vmem:[#allocation5 + $0x180] sm:$0xff]
    %v91 = vld [vmem:[#allocation5 + $0x188] sm:$0xff]
    %v92 = vld [vmem:[#allocation5 + $0x190] sm:$0xff]
    %v93 = vld [vmem:[#allocation5 + $0x198] sm:$0xff]
    %v94 = vld [vmem:[#allocation5 + $0x1a0] sm:$0xff]
    %v95 = vld [vmem:[#allocation5 + $0x1a8] sm:$0xff]
    %v96 = vld [vmem:[#allocation5 + $0x1b0] sm:$0xff]
    %v97 = vld [vmem:[#allocation5 + $0x1b8] sm:$0xff]
    %v98 = vld [vmem:[#allocation5 + $0x1c0] sm:$0xff]
    %v99 = vld [vmem:[#allocation5 + $0x1c8] sm:$0xff]
    %v100 = vld [vmem:[#allocation5 + $0x1d0] sm:$0xff]
    %v101 = vld [vmem:[#allocation5 + $0x1d8] sm:$0xff]
    %v102 = vld [vmem:[#allocation5 + $0x1e0] sm:$0xff]
    %v103 = vld [vmem:[#allocation5 + $0x1e8] sm:$0xff]
    %v104 = vld [vmem:[#allocation5 + $0x1f0] sm:$0xff]
    %v105 = vld [vmem:[#allocation5 + $0x1f8] sm:$0xff]
    %v106 = vld [vmem:[#allocation5 + $0x200] sm:$0xff]
    %v107 = vld [vmem:[#allocation5 + $0x208] sm:$0xff]
    %v108 = vld [vmem:[#allocation5 + $0x210] sm:$0xff]
    %v109 = vld [vmem:[#allocation5 + $0x218] sm:$0xff]
    %v110 = vld [vmem:[#allocation5 + $0x220] sm:$0x1]
    %v111 = vld [vmem:[#allocation5 + $0x221] sm:$0x1]
    %v112 = vld [vmem:[#allocation5 + $0x222] sm:$0x1]
    %v113 = vld [vmem:[#allocation5 + $0x223] sm:$0x1]
    %v114 = vld [vmem:[#allocation5 + $0x224] sm:$0x1]
    %v115 = vld [vmem:[#allocation5 + $0x225] sm:$0x1]
    %v116 = vlaneseq
    %v117 = vshrl.u32 %v116, 7
    %v118 = vsub.s32 0, %v117
    %v119 = vrot.slane %v110, %v118
    %vm120 = vcmask 261120
    %v122 = vsel %vm120, %v40, 0
    %v125 = vsel %vm120, %v41, 0
    %127 = vmatprep.subr.mxu0 0.0
    %128 = vmatpush1.msra.mxu0 %v42
    %129 = vmatprep.subr.mxu0 0.0
    %130 = vmatpush1.msra.mxu0 %v43
    %131 = vmatprep.subr.mxu0 0.0
    %132 = vmatpush1.msra.mxu0 %v44
    %133 = vmatprep.subr.mxu0 0.0
    %134 = vmatpush1.msra.mxu0 %v45
    %135 = vmatprep.subr.mxu0 0.0
    %136 = vmatpush1.msra.mxu0 0.0
    %137 = vmatprep.subr.mxu0 0.0
    %138 = vmatpush1.msra.mxu0 0.0
    %139 = vmatprep.subr.mxu0 0.0
    %140 = vmatpush1.msra.mxu0 0.0
    %141 = vmatprep.subr.mxu0 0.0
    %142 = vmatpush1.msra.mxu0 0.0
    %143 = vmatprep.subr.mxu0 0.0
    %144 = vmatpush1.msra.mxu0 0.0
    %145 = vmatprep.subr.mxu0 0.0
    %146 = vmatpush1.msra.mxu0 0.0
    %147 = vmatprep.subr.mxu0 0.0
    %148 = vmatpush1.msra.mxu0 0.0
    %149 = vmatprep.subr.mxu0 0.0
    %150 = vmatpush1.msra.mxu0 0.0
    %151 = vmatprep.subr.mxu0 0.0
    %152 = vmatpush1.msra.mxu0 0.0
    %153 = vmatprep.subr.mxu0 0.0
    %154 = vmatpush1.msra.mxu0 0.0
    %155 = vmatprep.subr.mxu0 0.0
    %156 = vmatpush1.msra.mxu0 0.0
    %157 = vmatprep.subr.mxu0 0.0
    %158 = vmatpush1.msra.mxu0 0.0
    %159 = vmatprep.subr.mxu0 0.0
    %160 = vmatpush1.msra.mxu0 0.0
    %161 = vmatprep.subr.mxu0 0.0
    %162 = vmatpush1.msra.mxu0 0.0
    %163 = vmatprep.subr.mxu0 0.0
    %164 = vmatpush1.msra.mxu0 0.0
    %165 = vmatprep.subr.mxu0 0.0
    %166 = vmatpush1.msra.mxu0 0.0
    %167 = vmatprep.subr.mxu0 0.0
    %168 = vmatpush1.msra.mxu0 0.0
    %169 = vmatprep.subr.mxu0 0.0
    %170 = vmatpush1.msra.mxu0 0.0
    %171 = vmatprep.subr.mxu0 0.0
    %172 = vmatpush1.msra.mxu0 0.0
    %173 = vmatprep.subr.mxu0 0.0
    %174 = vmatpush1.msra.mxu0 0.0
    %175 = vmatprep.subr.mxu0 0.0
    %176 = vmatpush1.msra.mxu0 0.0
    %177 = vmatprep.subr.mxu0 0.0
    %178 = vmatpush1.msra.mxu0 0.0
    %179 = vmatprep.subr.mxu0 0.0
    %180 = vmatpush1.msra.mxu0 0.0
    %181 = vmatprep.subr.mxu0 0.0
    %182 = vmatpush1.msra.mxu0 0.0
    %183 = vmatprep.subr.mxu0 0.0
    %184 = vmatpush1.msra.mxu0 0.0
    %185 = vmatprep.subr.mxu0 0.0
    %186 = vmatpush1.msra.mxu0 0.0
    %187 = vmatprep.subr.mxu0 0.0
    %188 = vmatpush1.msra.mxu0 0.0
    %189 = vmatprep.subr.mxu0 0.0
    %190 = vmatpush1.msra.mxu0 0.0
    %191 = vmatprep.mubr.f32.mxu0 0.0
    %192 = vmatmul.mubr.f32.gmra.mrb[0].mxu0 %v122
    %v193 = vpop.f32.mrb[0].mxu0
    %v194 = vadd.f32 %v119, %v193
    %v195 = vpop.f32.mrb[0].mxu0
    %196 = vmatprep.mubr.f32.mxu0 0.0
    %197 = vmatmul.mubr.f32.gmra.mrb[0].mxu0 %v125
    %v198 = vpop.f32.mrb[0].mxu0
    %v199 = vadd.f32 %v119, %v198
    %v200 = vpop.f32.mrb[0].mxu0
    %201 = vdwg.mxu0
    %v202 = vrot.slane %v194, 4
    %v203 = vmax.f32 %v194, %v202
    %v204 = vrot.slane %v203, 2
    %v205 = vmax.f32 %v203, %v204
    %v206 = vrot.slane %v205, 1
    %v207 = vmax.f32 %v205, %v206
    %v208 = vrot.slane %v199, 4
    %v209 = vmax.f32 %v199, %v208
    %v210 = vrot.slane %v209, 2
    %v211 = vmax.f32 %v209, %v210
    %v212 = vrot.slane %v211, 1
    %v213 = vmax.f32 %v211, %v212
    %v214 = vsub.f32 %v194, %v207
    %v215 = vsub.f32 %v199, %v213
    %v216 = vmul.f32 %v214, 1.442695
    %v217 = vpow.pop %v216
    %v218 = vmul.f32 %v215, 1.442695
    %v219 = vpow.pop %v218
    %v220 = vrot.slane %v217, 4
    %v221 = vadd.f32 %v217, %v220
    %v222 = vrot.slane %v221, 2
    %v223 = vadd.f32 %v221, %v222
    %v224 = vrot.slane %v223, 1
    %v225 = vadd.f32 %v223, %v224
    %v226 = vrot.slane %v219, 4
    %v227 = vadd.f32 %v219, %v226
    %v228 = vrot.slane %v227, 2
    %v229 = vadd.f32 %v227, %v228
    %v230 = vrot.slane %v229, 1
    %v231 = vadd.f32 %v229, %v230
    %v232 = vrcp.pop %v225
    %v233 = vmul.f32 %v217, %v232
    %v234 = vrcp.pop %v231
    %v235 = vmul.f32 %v219, %v234
    %236 = vmatprep.subr.mxu0 0.0
    %237 = vmatpush1.msra.mxu0 %v46
    %238 = vmatprep.subr.mxu0 0.0
    %239 = vmatpush1.msra.mxu0 %v47
    %240 = vmatprep.subr.mxu0 0.0
    %241 = vmatpush1.msra.mxu0 %v48
    %242 = vmatprep.subr.mxu0 0.0
    %243 = vmatpush1.msra.mxu0 %v49
    %244 = vmatprep.subr.mxu0 0.0
    %245 = vmatpush1.msra.mxu0 %v50
    %246 = vmatprep.subr.mxu0 0.0
    %247 = vmatpush1.msra.mxu0 %v51
    %248 = vmatprep.subr.mxu0 0.0
    %249 = vmatpush1.msra.mxu0 %v52
    %250 = vmatprep.subr.mxu0 0.0
    %251 = vmatpush1.msra.mxu0 %v53
    %252 = vmatprep.subr.mxu0 0.0
    %253 = vmatpush1.msra.mxu0 %v54
    %254 = vmatprep.subr.mxu0 0.0
    %255 = vmatpush1.msra.mxu0 %v55
    %256 = vmatprep.subr.mxu0 0.0
    %257 = vmatpush1.msra.mxu0 %v56
    %258 = vmatprep.subr.mxu0 0.0
    %259 = vmatpush1.msra.mxu0 %v57
    %260 = vmatprep.subr.mxu0 0.0
    %261 = vmatpush1.msra.mxu0 %v58
    %262 = vmatprep.subr.mxu0 0.0
    %263 = vmatpush1.msra.mxu0 %v59
    %264 = vmatprep.subr.mxu0 0.0
    %265 = vmatpush1.msra.mxu0 %v60
    %266 = vmatprep.subr.mxu0 0.0
    %267 = vmatpush1.msra.mxu0 %v61
    %268 = vmatprep.subr.mxu0 0.0
    %269 = vmatpush1.msra.mxu0 0.0
    %270 = vmatprep.subr.mxu0 0.0
    %271 = vmatpush1.msra.mxu0 0.0
    %272 = vmatprep.subr.mxu0 0.0
    %273 = vmatpush1.msra.mxu0 0.0
    %274 = vmatprep.subr.mxu0 0.0
    %275 = vmatpush1.msra.mxu0 0.0
    %276 = vmatprep.subr.mxu0 0.0
    %277 = vmatpush1.msra.mxu0 0.0
    %278 = vmatprep.subr.mxu0 0.0
    %279 = vmatpush1.msra.mxu0 0.0
    %280 = vmatprep.subr.mxu0 0.0
    %281 = vmatpush1.msra.mxu0 0.0
    %282 = vmatprep.subr.mxu0 0.0
    %283 = vmatpush1.msra.mxu0 0.0
    %284 = vmatprep.subr.mxu0 0.0
    %285 = vmatpush1.msra.mxu0 0.0
    %286 = vmatprep.subr.mxu0 0.0
    %287 = vmatpush1.msra.mxu0 0.0
    %288 = vmatprep.subr.mxu0 0.0
    %289 = vmatpush1.msra.mxu0 0.0
    %290 = vmatprep.subr.mxu0 0.0
    %291 = vmatpush1.msra.mxu0 0.0
    %292 = vmatprep.subr.mxu0 0.0
    %293 = vmatpush1.msra.mxu0 0.0
    %294 = vmatprep.subr.mxu0 0.0
    %295 = vmatpush1.msra.mxu0 0.0
    %296 = vmatprep.subr.mxu0 0.0
    %297 = vmatpush1.msra.mxu0 0.0
    %298 = vmatprep.subr.mxu0 0.0
    %299 = vmatpush1.msra.mxu0 0.0
    %300 = vmatprep.mubr.f32.mxu0 0.0
    %301 = vmatmul.mubr.f32.gmra.mrb[0].mxu0 %v233
    %v302 = vpop.f32.mrb[0].mxu0
    %v303 = vadd.f32 0.0, %v302
    %v304 = vpop.f32.mrb[0].mxu0
    %305 = vmatprep.mubr.f32.mxu0 0.0
    %306 = vmatmul.mubr.f32.gmra.mrb[0].mxu0 %v235
    %v307 = vpop.f32.mrb[0].mxu0
    %v308 = vadd.f32 0.0, %v307
    %v309 = vpop.f32.mrb[0].mxu0
    %310 = vdwg.mxu0
    %v311 = vmul.f32 %v303, %v194
    %v312 = vmul.f32 %v308, %v199
    %v313 = vrot.slane %v311, 4
    %v314 = vadd.f32 %v311, %v313
    %v315 = vrot.slane %v314, 2
    %v316 = vadd.f32 %v314, %v315
    %v317 = vrot.slane %v316, 1
    %v318 = vadd.f32 %v316, %v317
    %v319 = vrot.slane %v312, 4
    %v320 = vadd.f32 %v312, %v319
    %v321 = vrot.slane %v320, 2
    %v322 = vadd.f32 %v320, %v321
    %v323 = vrot.slane %v322, 1
    %v324 = vadd.f32 %v322, %v323
    %v325 = vlaneseq
    %v326 = vshrl.u32 %v325, 7
    %v327 = vsub.s32 0, %v326
    %v328 = vrot.slane %v111, %v327
    %vm331 = vcmask 1041409
    %v332 = vsel %vm331, %v324, %v318
    %334 = vmatprep.subr.mxu0 0.0
    %335 = vmatpush1.msra.mxu0 %v62
    %336 = vmatprep.subr.mxu0 0.0
    %337 = vmatpush1.msra.mxu0 %v63
    %338 = vmatprep.subr.mxu0 0.0
    %339 = vmatpush1.msra.mxu0 %v64
    %340 = vmatprep.subr.mxu0 0.0
    %341 = vmatpush1.msra.mxu0 %v65
    %342 = vmatprep.subr.mxu0 0.0
    %343 = vmatpush1.msra.mxu0 %v66
    %344 = vmatprep.subr.mxu0 0.0
    %345 = vmatpush1.msra.mxu0 %v67
    %346 = vmatprep.subr.mxu0 0.0
    %347 = vmatpush1.msra.mxu0 %v68
    %348 = vmatprep.subr.mxu0 0.0
    %349 = vmatpush1.msra.mxu0 %v69
    %350 = vmatprep.subr.mxu0 0.0
    %351 = vmatpush1.msra.mxu0 %v70
    %352 = vmatprep.subr.mxu0 0.0
    %353 = vmatpush1.msra.mxu0 %v71
    %354 = vmatprep.subr.mxu0 0.0
    %355 = vmatpush1.msra.mxu0 %v72
    %356 = vmatprep.subr.mxu0 0.0
    %357 = vmatpush1.msra.mxu0 %v73
    %358 = vmatprep.subr.mxu0 0.0
    %359 = vmatpush1.msra.mxu0 %v74
    %360 = vmatprep.subr.mxu0 0.0
    %361 = vmatpush1.msra.mxu0 %v75
    %362 = vmatprep.subr.mxu0 0.0
    %363 = vmatpush1.msra.mxu0 %v76
    %364 = vmatprep.subr.mxu0 0.0
    %365 = vmatpush1.msra.mxu0 %v77
    %366 = vmatprep.subr.mxu0 0.0
    %367 = vmatpush1.msra.mxu0 0.0
    %368 = vmatprep.subr.mxu0 0.0
    %369 = vmatpush1.msra.mxu0 0.0
    %370 = vmatprep.subr.mxu0 0.0
    %371 = vmatpush1.msra.mxu0 0.0
    %372 = vmatprep.subr.mxu0 0.0
    %373 = vmatpush1.msra.mxu0 0.0
    %374 = vmatprep.subr.mxu0 0.0
    %375 = vmatpush1.msra.mxu0 0.0
    %376 = vmatprep.subr.mxu0 0.0
    %377 = vmatpush1.msra.mxu0 0.0
    %378 = vmatprep.subr.mxu0 0.0
    %379 = vmatpush1.msra.mxu0 0.0
    %380 = vmatprep.subr.mxu0 0.0
    %381 = vmatpush1.msra.mxu0 0.0
    %382 = vmatprep.subr.mxu0 0.0
    %383 = vmatpush1.msra.mxu0 0.0
    %384 = vmatprep.subr.mxu0 0.0
    %385 = vmatpush1.msra.mxu0 0.0
    %386 = vmatprep.subr.mxu0 0.0
    %387 = vmatpush1.msra.mxu0 0.0
    %388 = vmatprep.subr.mxu0 0.0
    %389 = vmatpush1.msra.mxu0 0.0
    %390 = vmatprep.subr.mxu0 0.0
    %391 = vmatpush1.msra.mxu0 0.0
    %392 = vmatprep.subr.mxu0 0.0
    %393 = vmatpush1.msra.mxu0 0.0
    %394 = vmatprep.subr.mxu0 0.0
    %395 = vmatpush1.msra.mxu0 0.0
    %396 = vmatprep.subr.mxu0 0.0
    %397 = vmatpush1.msra.mxu0 0.0
    %398 = vmatprep.mubr.f32.mxu0 0.0
    %399 = vmatmul.mubr.f32.gmra.mrb[0].mxu0 %v332
    %v400 = vpop.f32.mrb[0].mxu0
    %v401 = vadd.f32 %v328, %v400
    %v402 = vpop.f32.mrb[0].mxu0
    %403 = vdwg.mxu0
    %vm404 = vcmask 1041408
    %v405 = vsel %vm404, %v401, 0.0
    %406 = vadd.xlane.f32.xlu0 %v405
    %v407 = vpop.xlane.xlu0 %406
    %v408 = vmul.f32 %v407, 0.03125
    %v409 = vmul.f32 %v401, %v401
    %v410 = vsel %vm404, %v409, 0.0
    %411 = vadd.xlane.f32.xlu0 %v410
    %v412 = vpop.xlane.xlu0 %411
    %v413 = vmul.f32 %v412, 0.03125
    %v414 = vmul.f32 %v408, %v408
    %v415 = vsub.f32 %v413, %v414
    %v416 = vsub.f32 %v401, %v408
    %v417 = vadd.f32 %v415, 1e-06
    %v418 = vrsqrt.pop %v417
    %v419 = vmul.f32 %v416, %v418
    %v420 = vlaneseq
    %v421 = vshrl.u32 %v420, 7
    %v422 = vsub.s32 0, %v421
    %v423 = vrot.slane %v112, %v422
    %v424 = vmul.f32 %v419, %v423
    %v425 = vlaneseq
    %v426 = vshrl.u32 %v425, 7
    %v427 = vsub.s32 0, %v426
    %v428 = vrot.slane %v113, %v427
    %v429 = vadd.f32 %v424, %v428
    %v430 = vlaneseq
    %v431 = vshrl.u32 %v430, 7
    %v432 = vsub.s32 0, %v431
    %v433 = vrot.slane %v114, %v432
    %434 = vmatprep.subr.mxu0 0.0
    %435 = vmatpush1.msra.mxu0 %v78
    %436 = vmatprep.subr.mxu0 0.0
    %437 = vmatpush1.msra.mxu0 %v79
    %438 = vmatprep.subr.mxu0 0.0
    %439 = vmatpush1.msra.mxu0 %v80
    %440 = vmatprep.subr.mxu0 0.0
    %441 = vmatpush1.msra.mxu0 %v81
    %442 = vmatprep.subr.mxu0 0.0
    %443 = vmatpush1.msra.mxu0 %v82
    %444 = vmatprep.subr.mxu0 0.0
    %445 = vmatpush1.msra.mxu0 %v83
    %446 = vmatprep.subr.mxu0 0.0
    %447 = vmatpush1.msra.mxu0 %v84
    %448 = vmatprep.subr.mxu0 0.0
    %449 = vmatpush1.msra.mxu0 %v85
    %450 = vmatprep.subr.mxu0 0.0
    %451 = vmatpush1.msra.mxu0 %v86
    %452 = vmatprep.subr.mxu0 0.0
    %453 = vmatpush1.msra.mxu0 %v87
    %454 = vmatprep.subr.mxu0 0.0
    %455 = vmatpush1.msra.mxu0 %v88
    %456 = vmatprep.subr.mxu0 0.0
    %457 = vmatpush1.msra.mxu0 %v89
    %458 = vmatprep.subr.mxu0 0.0
    %459 = vmatpush1.msra.mxu0 %v90
    %460 = vmatprep.subr.mxu0 0.0
    %461 = vmatpush1.msra.mxu0 %v91
    %462 = vmatprep.subr.mxu0 0.0
    %463 = vmatpush1.msra.mxu0 %v92
    %464 = vmatprep.subr.mxu0 0.0
    %465 = vmatpush1.msra.mxu0 %v93
    %466 = vmatprep.subr.mxu0 0.0
    %467 = vmatpush1.msra.mxu0 0.0
    %468 = vmatprep.subr.mxu0 0.0
    %469 = vmatpush1.msra.mxu0 0.0
    %470 = vmatprep.subr.mxu0 0.0
    %471 = vmatpush1.msra.mxu0 0.0
    %472 = vmatprep.subr.mxu0 0.0
    %473 = vmatpush1.msra.mxu0 0.0
    %474 = vmatprep.subr.mxu0 0.0
    %475 = vmatpush1.msra.mxu0 0.0
    %476 = vmatprep.subr.mxu0 0.0
    %477 = vmatpush1.msra.mxu0 0.0
    %478 = vmatprep.subr.mxu0 0.0
    %479 = vmatpush1.msra.mxu0 0.0
    %480 = vmatprep.subr.mxu0 0.0
    %481 = vmatpush1.msra.mxu0 0.0
    %482 = vmatprep.subr.mxu0 0.0
    %483 = vmatpush1.msra.mxu0 0.0
    %484 = vmatprep.subr.mxu0 0.0
    %485 = vmatpush1.msra.mxu0 0.0
    %486 = vmatprep.subr.mxu0 0.0
    %487 = vmatpush1.msra.mxu0 0.0
    %488 = vmatprep.subr.mxu0 0.0
    %489 = vmatpush1.msra.mxu0 0.0
    %490 = vmatprep.subr.mxu0 0.0
    %491 = vmatpush1.msra.mxu0 0.0
    %492 = vmatprep.subr.mxu0 0.0
    %493 = vmatpush1.msra.mxu0 0.0
    %494 = vmatprep.subr.mxu0 0.0
    %495 = vmatpush1.msra.mxu0 0.0
    %496 = vmatprep.subr.mxu0 0.0
    %497 = vmatpush1.msra.mxu0 0.0
    %498 = vmatprep.mubr.f32.mxu0 0.0
    %499 = vmatmul.mubr.f32.gmra.mrb[0].mxu0 %v429
    %v500 = vpop.f32.mrb[0].mxu0
    %v501 = vadd.f32 %v433, %v500
    %v502 = vpop.f32.mrb[0].mxu0
    %503 = vdwg.mxu0
    %v504 = vmul.f32 %v501, 0.5
    %v505 = vmul.f32 %v501, 0.044715
    %v506 = vmul.f32 %v505, %v501
    %v507 = vmul.f32 %v506, %v501
    %v508 = vadd.f32 %v501, %v507
    %v509 = vmul.f32 %v508, 0.7978846
    %v510 = vtanh.pop %v509
    %v511 = vadd.f32 %v510, 1.0
    %v512 = vmul.f32 %v504, %v511
    %v513 = vlaneseq
    %v514 = vshrl.u32 %v513, 7
    %v515 = vsub.s32 0, %v514
    %v516 = vrot.slane %v115, %v515
    %517 = vmatprep.subr.mxu0 0.0
    %518 = vmatpush1.msra.mxu0 %v94
    %519 = vmatprep.subr.mxu0 0.0
    %520 = vmatpush1.msra.mxu0 %v95
    %521 = vmatprep.subr.mxu0 0.0
    %522 = vmatpush1.msra.mxu0 %v96
    %523 = vmatprep.subr.mxu0 0.0
    %524 = vmatpush1.msra.mxu0 %v97
    %525 = vmatprep.subr.mxu0 0.0
    %526 = vmatpush1.msra.mxu0 %v98
    %527 = vmatprep.subr.mxu0 0.0
    %528 = vmatpush1.msra.mxu0 %v99
    %529 = vmatprep.subr.mxu0 0.0
    %530 = vmatpush1.msra.mxu0 %v100
    %531 = vmatprep.subr.mxu0 0.0
    %532 = vmatpush1.msra.mxu0 %v101
    %533 = vmatprep.subr.mxu0 0.0
    %534 = vmatpush1.msra.mxu0 %v102
    %535 = vmatprep.subr.mxu0 0.0
    %536 = vmatpush1.msra.mxu0 %v103
    %537 = vmatprep.subr.mxu0 0.0
    %538 = vmatpush1.msra.mxu0 %v104
    %539 = vmatprep.subr.mxu0 0.0
    %540 = vmatpush1.msra.mxu0 %v105
    %541 = vmatprep.subr.mxu0 0.0
    %542 = vmatpush1.msra.mxu0 %v106
    %543 = vmatprep.subr.mxu0 0.0
    %544 = vmatpush1.msra.mxu0 %v107
    %545 = vmatprep.subr.mxu0 0.0
    %546 = vmatpush1.msra.mxu0 %v108
    %547 = vmatprep.subr.mxu0 0.0
    %548 = vmatpush1.msra.mxu0 %v109
    %549 = vmatprep.subr.mxu0 0.0
    %550 = vmatpush1.msra.mxu0 0.0
    %551 = vmatprep.subr.mxu0 0.0
    %552 = vmatpush1.msra.mxu0 0.0
    %553 = vmatprep.subr.mxu0 0.0
    %554 = vmatpush1.msra.mxu0 0.0
    %555 = vmatprep.subr.mxu0 0.0
    %556 = vmatpush1.msra.mxu0 0.0
    %557 = vmatprep.subr.mxu0 0.0
    %558 = vmatpush1.msra.mxu0 0.0
    %559 = vmatprep.subr.mxu0 0.0
    %560 = vmatpush1.msra.mxu0 0.0
    %561 = vmatprep.subr.mxu0 0.0
    %562 = vmatpush1.msra.mxu0 0.0
    %563 = vmatprep.subr.mxu0 0.0
    %564 = vmatpush1.msra.mxu0 0.0
    %565 = vmatprep.subr.mxu0 0.0
    %566 = vmatpush1.msra.mxu0 0.0
    %567 = vmatprep.subr.mxu0 0.0
    %568 = vmatpush1.msra.mxu0 0.0
    %569 = vmatprep.subr.mxu0 0.0
    %570 = vmatpush1.msra.mxu0 0.0
    %571 = vmatprep.subr.mxu0 0.0
    %572 = vmatpush1.msra.mxu0 0.0
    %573 = vmatprep.subr.mxu0 0.0
    %574 = vmatpush1.msra.mxu0 0.0
    %575 = vmatprep.subr.mxu0 0.0
    %576 = vmatpush1.msra.mxu0 0.0
    %577 = vmatprep.subr.mxu0 0.0
    %578 = vmatpush1.msra.mxu0 0.0
    %579 = vmatprep.subr.mxu0 0.0
    %580 = vmatpush1.msra.mxu0 0.0
    %581 = vmatprep.mubr.f32.mxu0 0.0
    %582 = vmatmul.mubr.f32.gmra.mrb[0].mxu0 %v512
    %v583 = vpop.f32.mrb[0].mxu0
    %v584 = vadd.f32 %v516, %v583
    %v585 = vpop.f32.mrb[0].mxu0
    %586 = vdwg.mxu0
    %v587 = vadd.f32 %v401, %v584
    %588 = vst [vmem:[#allocation7] sm:$0x3] %v587
    // Predicated region
    $region18: #{tpu_custom_call.1} parent=1 // pred_check
      _
    $region19: #{tpu_custom_call.1} parent=1 // pred_check_branch
      %590 = sbr.rel (0) target = $region21
    $region20: #{tpu_custom_call.1} parent=1 // pred_region
      %s592 = ssub.s32 32, 32
      %593 = vsyncadd [#allocation4], %s592
      %s595 = sshll.u32 [#allocation7], 4
      %s596 = int_to_ptr.vmem [resolvable:$true] %s595
      %598 = dma.vmem_to_hbm [thread:$0]  %s596, 32, %s2, [#allocation4]
    $region21: #{tpu_custom_call.1} parent=1 // pred_fallthru
      _
    // Predicated region
    $region22: #{tpu_custom_call.1} parent=1 // pred_check
      _
    $region23: #{tpu_custom_call.1} parent=1 // pred_check_branch
      %600 = sbr.rel (0) target = $region25
    $region24: #{tpu_custom_call.1} parent=1 // pred_region
      %601 = dma.done [#allocation4], 32
    $region25: #{tpu_custom_call.1} parent=1 // pred_fallthru
      _
    %602 = vsyncpa [#allocation3], 1
    %603 = vsyncpa [#allocation6], 1
    %604 = vsyncpa [#allocation4], 1

</llo_original>
